<compile_context>
chip_gen: v5e
topology: v5e:2x2
jax: 0.10.0
libtpu: 0.0.40
codegen_flags: <defaults>
</compile_context>

<pallas_src>
import functools

import jax
import jax.numpy as jnp
from jax.experimental import pallas as pl
from jax.experimental.pallas import tpu as pltpu


# ---- LSNNParameters defaults (deterministic, from norse) -------------------
TAU_SYN_INV = 1.0 / 5e-3      # 200.0
TAU_MEM_INV = 1.0 / 1e-2      # 100.0
TAU_ADAPT_INV = 1.0 / 700.0
V_LEAK = 0.0
V_TH = 1.0
V_RESET = 0.0
BETA = 1.8
DT = 0.001

# ~512 KiB per f32 tile buffer.  General path: 8 arrays x 2 pipeline buffers
# x 512 KiB = 8 MiB resident -> safe on v5e (16 MiB default scoped VMEM),
# v6e (32 MiB default) and v7x (64 MiB physical), no vmem_limit_bytes needed.
_TILE_BYTES = 512 * 1024


# ---------------------------------------------------------------------------
# Kernels
# ---------------------------------------------------------------------------
def _lsnn_kernel(x_ref, v_ref, i_ref, b_ref,
                 z_ref, vo_ref, io_ref, bo_ref, *, dt):
    x = x_ref[...]
    v = v_ref[...]
    i = i_ref[...]
    b = b_ref[...]

    # dt*tau products are python floats -> folded at trace time.
    a_mem = dt * TAU_MEM_INV
    a_syn = dt * TAU_SYN_INV
    a_adapt = dt * TAU_ADAPT_INV

    v_decayed = v + a_mem * ((V_LEAK - v) + i)
    i_decayed = i + (-a_syn) * i
    b_decayed = b + a_adapt * (V_TH - b)

    spike = (v_decayed - b_decayed) > 0.0
    z = spike.astype(x.dtype)

    vo_ref[...] = jnp.where(spike, jnp.asarray(V_RESET, x.dtype), v_decayed)
    io_ref[...] = i_decayed + x
    bo_ref[...] = b_decayed + z * (TAU_ADAPT_INV * BETA)
    z_ref[...] = spike.astype(z_ref.dtype)


def _lsnn_init_kernel(x_ref, z_ref, vo_ref, io_ref, bo_ref, *, dt):
    # state=None path: v = v_leak, i = 0, b = 0 are scalar constants, so
    # everything except i' = i_decayed + x folds at trace time.  Only x is
    # read from HBM (input traffic cut 4x vs. the general kernel).
    x = x_ref[...]
    v_decayed = V_LEAK + dt * TAU_MEM_INV * ((V_LEAK - V_LEAK) + 0.0)
    i_decayed = 0.0
    b_decayed = 0.0 + dt * TAU_ADAPT_INV * (V_TH - 0.0)
    spike = (v_decayed - b_decayed) > 0.0       # python bool at trace time
    z_val = 1.0 if spike else 0.0
    v_new = V_RESET if spike else v_decayed
    b_new = b_decayed + z_val * (TAU_ADAPT_INV * BETA)

    z_ref[...] = jnp.full(x.shape, z_val, z_ref.dtype)
    vo_ref[...] = jnp.full(x.shape, v_new, x.dtype)
    io_ref[...] = x + jnp.asarray(i_decayed, x.dtype)
    bo_ref[...] = jnp.full(x.shape, b_new, x.dtype)


# ---------------------------------------------------------------------------
# pallas_call wrappers (1-D parallel row grid over a lane-dense 2-D slab)
# ---------------------------------------------------------------------------
def _tile_rows(rows, lanes, itemsize=4):
    target = max(8, _TILE_BYTES // (lanes * itemsize))
    tr = min(rows, target)
    if tr < rows:
        tr = max(8, (tr // 8) * 8)   # keep the (8, 128) tiling constraint
    return tr


def _run_flat(x2d, v2d, i2d, b2d, dt, z_dtype):
    rows, lanes = x2d.shape
    tile_r = _tile_rows(rows, lanes)
    spec = pl.BlockSpec((tile_r, lanes), lambda r: (r, 0))
    sds = jax.ShapeDtypeStruct((rows, lanes), x2d.dtype)
    z_sds = jax.ShapeDtypeStruct((rows, lanes), z_dtype)
    return pl.pallas_call(
        functools.partial(_lsnn_kernel, dt=dt),
        grid=(pl.cdiv(rows, tile_r),),
        in_specs=[spec, spec, spec, spec],
        out_specs=(spec, spec, spec, spec),
        out_shape=(z_sds, sds, sds, sds),
        # Recurrent state: v/i/b update their outputs in place when the caller
        # donates the state buffers (XLA inserts copies otherwise, so this is
        # always correct).
        input_output_aliases={1: 1, 2: 2, 3: 3},
        compiler_params=pltpu.CompilerParams(
            dimension_semantics=("parallel",)),
    )(x2d, v2d, i2d, b2d)


def _run_flat_init(x2d, dt, z_dtype):
    rows, lanes = x2d.shape
    tile_r = _tile_rows(rows, lanes)
    spec = pl.BlockSpec((tile_r, lanes), lambda r: (r, 0))
    sds = jax.ShapeDtypeStruct((rows, lanes), x2d.dtype)
    z_sds = jax.ShapeDtypeStruct((rows, lanes), z_dtype)
    return pl.pallas_call(
        functools.partial(_lsnn_init_kernel, dt=dt),
        grid=(pl.cdiv(rows, tile_r),),
        in_specs=[spec],
        out_specs=(spec, spec, spec, spec),
        out_shape=(z_sds, sds, sds, sds),
        input_output_aliases={0: 2},   # x may be reused in place as i'
        compiler_params=pltpu.CompilerParams(
            dimension_semantics=("parallel",)),
    )(x2d)


# ---------------------------------------------------------------------------
# Public wrapper (NCHW <-> lane-dense slab plumbing)
# ---------------------------------------------------------------------------
def _choose_lanes(n):
    # Prefer the widest lane-dense slab that divides n (no padding copy).
    for lanes in (1024, 512, 256, 128):
        if n % lanes == 0:
            return lanes, 0
    # Rare ragged fallback: pad the flat tail to a multiple of 128.
    return 128, (-n) % 128


def lsnn_feed_forward_cell(input_tensor, state=None, dt=DT, z_dtype=None):
    """Pallas implementation of LSNNFeedForwardCell.forward.

    input_tensor: f32 array of any shape (e.g. NCHW).
    state: optional tuple (v, i, b) with the same shape as input_tensor.
    z_dtype: optional narrower dtype for the spike output (default: input dtype,
             matching the PyTorch module).
    Returns (z, (v_new, i_new, b_new)).
    """
    shape = input_tensor.shape
    dtype = input_tensor.dtype
    if z_dtype is None:
        z_dtype = dtype

    n = int(input_tensor.size)
    lanes, pad = _choose_lanes(n)

    def to2d(a):
        a = a.reshape(-1)
        if pad:
            a = jnp.pad(a, (0, pad))
        return a.reshape(-1, lanes)

    def back(a):
        a = a.reshape(-1)
        if pad:
            a = a[:n]
        return a.reshape(shape)

    x2d = to2d(input_tensor)
    if state is None:
        # Fast path: only x is streamed from HBM.
        z2d, v2d, i2d, b2d = _run_flat_init(x2d, dt, z_dtype)
    else:
        v, i, b = state
        z2d, v2d, i2d, b2d = _run_flat(x2d, to2d(v), to2d(i), to2d(b),
                                       dt, z_dtype)

    return back(z2d), (back(v2d), back(i2d), back(b2d))


# ---------------------------------------------------------------------------
# Pure-JAX reference (exact norse formulas) and test
# ---------------------------------------------------------------------------
def _reference(x, v, i, b, dt=DT):
    dv = dt * TAU_MEM_INV * ((V_LEAK - v) + i)
    v_decayed = v + dv
    di = -dt * TAU_SYN_INV * i
    i_decayed = i + di
    db = dt * TAU_ADAPT_INV * (V_TH - b)
    b_decayed = b + db
    z = (v_decayed - b_decayed > 0.0).astype(x.dtype)
    v_new = (1.0 - z) * v_decayed + z * V_RESET
    i_new = i_decayed + x
    b_new = b_decayed + z * (TAU_ADAPT_INV * BETA)
    return z, (v_new, i_new, b_new)


if __name__ == "__main__":
    key = jax.random.PRNGKey(0)
    k1, k2, k3, k4, k5 = jax.random.split(key, 5)

    # NCHW input, small shape
    B, C, H, W = 2, 4, 16, 16
    x = jax.random.normal(k1, (B, C, H, W), jnp.float32)

    # --- state=None fast path ---
    z0, (v0, i0, b0) = lsnn_feed_forward_cell(x, None)
    jax.block_until_ready((z0, v0, i0, b0))
    zr0, (vr0, ir0, br0) = _reference(
        x, jnp.zeros_like(x), jnp.zeros_like(x), jnp.zeros_like(x))
    for got, want in ((z0, zr0), (v0, vr0), (i0, ir0), (b0, br0)):
        assert jnp.allclose(got, want, atol=1e-6, rtol=1e-6), "mismatch (init)"

    # --- general path with nontrivial state ---
    v = jax.random.normal(k2, (B, C, H, W), jnp.float32) * 1.5
    i = jax.random.normal(k3, (B, C, H, W), jnp.float32)
    b = jax.random.uniform(k4, (B, C, H, W), jnp.float32)
    z1, (v1, i1, b1) = lsnn_feed_forward_cell(x, (v, i, b))
    jax.block_until_ready((z1, v1, i1, b1))
    zr, (vr, ir, br) = _reference(x, v, i, b)
    for got, want in ((z1, zr), (v1, vr), (i1, ir), (b1, br)):
        assert jnp.allclose(got, want, atol=1e-6, rtol=1e-6), "mismatch (state)"

    # --- ragged-size fallback path (total elements not a multiple of 128) ---
    xo = jax.random.normal(k5, (2, 3, 5, 17), jnp.float32)
    vo = jnp.ones_like(xo) * 0.3
    io = jnp.ones_like(xo) * -0.2
    bo = jnp.ones_like(xo) * 0.1
    z2, (v2, i2, b2) = lsnn_feed_forward_cell(xo, (vo, io, bo))
    jax.block_until_ready((z2, v2, i2, b2))
    zr2, (vr2, ir2, br2) = _reference(xo, vo, io, bo)
    for got, want in ((z2, zr2), (v2, vr2), (i2, ir2), (b2, br2)):
        assert jnp.allclose(got, want, atol=1e-6, rtol=1e-6), "mismatch (ragged)"

    print("KERNEL_OK")
</pallas_src>

<mosaic_0001>
module attributes {stable_mosaic.version = 11 : i64} {
  func.func @_lsnn_init_kernel(%arg0: i32, %arg1: memref<2x1024xf32, #tpu.memory_space<vmem>>, %arg2: memref<2x1024xf32, #tpu.memory_space<vmem>>, %arg3: memref<2x1024xf32, #tpu.memory_space<vmem>>, %arg4: memref<2x1024xf32, #tpu.memory_space<vmem>>, %arg5: memref<2x1024xf32, #tpu.memory_space<vmem>>) attributes {dimension_semantics = [#tpu.dimension_semantics<parallel>], iteration_bounds = array<i64: 1>, scalar_prefetch = 0 : i64, scratch_operands = 0 : i64, tpu.core_type = #tpu.core_type<tc>, window_params = [{transform_indices = @transform_0, window_bounds = array<i64: 2, 1024>}, {transform_indices = @transform_1, window_bounds = array<i64: 2, 1024>}, {transform_indices = @transform_2, window_bounds = array<i64: 2, 1024>}, {transform_indices = @transform_3, window_bounds = array<i64: 2, 1024>}, {transform_indices = @transform_4, window_bounds = array<i64: 2, 1024>}]} {
    %c0 = arith.constant 0 : index
    %c0_0 = arith.constant 0 : index
    %0 = vector.load %arg1[%c0, %c0_0] : memref<2x1024xf32, #tpu.memory_space<vmem>>, vector<2x1024xf32>
    %cst = arith.constant 0.000000e+00 : f32
    %1 = vector.broadcast %cst : f32 to vector<2x1024xf32>
    %c0_1 = arith.constant 0 : index
    %c0_2 = arith.constant 0 : index
    %2 = vector.load %arg2[%c0_1, %c0_2] : memref<2x1024xf32, #tpu.memory_space<vmem>>, vector<2x1024xf32>
    tpu.vector_store %arg2[%c0_1, %c0_2], %1 {strides = array<i32>} : memref<2x1024xf32, #tpu.memory_space<vmem>>, vector<2x1024xf32>,
    %cst_3 = arith.constant 0.000000e+00 : f32
    %3 = vector.broadcast %cst_3 : f32 to vector<2x1024xf32>
    %c0_4 = arith.constant 0 : index
    %c0_5 = arith.constant 0 : index
    %4 = vector.load %arg3[%c0_4, %c0_5] : memref<2x1024xf32, #tpu.memory_space<vmem>>, vector<2x1024xf32>
    tpu.vector_store %arg3[%c0_4, %c0_5], %3 {strides = array<i32>} : memref<2x1024xf32, #tpu.memory_space<vmem>>, vector<2x1024xf32>,
    %cst_6 = arith.constant 0.000000e+00 : f32
    %5 = vector.broadcast %cst_6 : f32 to vector<2x1024xf32>
    %6 = arith.addf %0, %5 : vector<2x1024xf32>
    %c0_7 = arith.constant 0 : index
    %c0_8 = arith.constant 0 : index
    %7 = vector.load %arg4[%c0_7, %c0_8] : memref<2x1024xf32, #tpu.memory_space<vmem>>, vector<2x1024xf32>
    tpu.vector_store %arg4[%c0_7, %c0_8], %6 {strides = array<i32>} : memref<2x1024xf32, #tpu.memory_space<vmem>>, vector<2x1024xf32>,
    %cst_9 = arith.constant 1.42857141E-6 : f32
    %8 = vector.broadcast %cst_9 : f32 to vector<2x1024xf32>
    %c0_10 = arith.constant 0 : index
    %c0_11 = arith.constant 0 : index
    %9 = vector.load %arg5[%c0_10, %c0_11] : memref<2x1024xf32, #tpu.memory_space<vmem>>, vector<2x1024xf32>
    tpu.vector_store %arg5[%c0_10, %c0_11], %8 {strides = array<i32>} : memref<2x1024xf32, #tpu.memory_space<vmem>>, vector<2x1024xf32>,
    return
  }
  func.func @transform_0(%arg0: i32) -> (i32, i32) {
    %c0_i32 = arith.constant 0 : i32
    %c0_i32_0 = arith.constant 0 : i32
    return %arg0, %c0_i32 : i32, i32
  }
  func.func @transform_1(%arg0: i32) -> (i32, i32) {
    %c0_i32 = arith.constant 0 : i32
    %c0_i32_0 = arith.constant 0 : i32
    return %arg0, %c0_i32 : i32, i32
  }
  func.func @transform_2(%arg0: i32) -> (i32, i32) {
    %c0_i32 = arith.constant 0 : i32
    %c0_i32_0 = arith.constant 0 : i32
    return %arg0, %c0_i32 : i32, i32
  }
  func.func @transform_3(%arg0: i32) -> (i32, i32) {
    %c0_i32 = arith.constant 0 : i32
    %c0_i32_0 = arith.constant 0 : i32
    return %arg0, %c0_i32 : i32, i32
  }
  func.func @transform_4(%arg0: i32) -> (i32, i32) {
    %c0_i32 = arith.constant 0 : i32
    %c0_i32_0 = arith.constant 0 : i32
    return %arg0, %c0_i32 : i32, i32
  }
}

</mosaic_0001>

<llo_original>
// kernel: tpu_custom_call.1
$region0: #{tpu_custom_call.1}
  #allocation0 [shape = 'u32[]', space=smem, size = 0x4, offset = 0x4, fixed_abs, tag = 'smem constant byte address 0x4 - core index']
  #allocation1 [shape = 'u32[72,128]{1,0:T(1,128)}', space=vmem, size = 0x9000, scoped, tag = 'internal scratch']
  %s0 = inlined_call_operand.hbm [shape: f32[2,1024], index: 0, kind: input, shape index: {}, may-alias: {0,3}]
  %s1 = inlined_call_operand.hbm [shape: f32[2,1024], index: 1, kind: output, shape index: {0}]
  %s2 = inlined_call_operand.hbm [shape: f32[2,1024], index: 2, kind: output, shape index: {1}]
  %s3 = inlined_call_operand.hbm [shape: f32[2,1024], index: 3, kind: output, shape index: {2}, may-alias: {0,3}]
  %s4 = inlined_call_operand.hbm [shape: f32[2,1024], index: 4, kind: output, shape index: {3}]
  %5 = xla_tuple %s1, %s2, %s3, %s4
  %s6 = sld [smem:[#allocation0]]
  $region42: #{tpu_custom_call.1} parent=0
    _
  %s8 = ssub.s32 1, %s6
  %s9 = scalar_select 0, %s8, %s6
  $region1: #{tpu_custom_call.1} parent=0
    #allocation2 [shape = 'u8[8192]{0}', space=vmem, size = 0x2000, scoped, tag = 'input window, operand 0, single buffered']
    #allocation3 [shape = 's32[1]{0}', space=sflag, size = 0x4, scoped, tag = 'scoped memory for tpu_custom_call.1']
    #allocation4 [shape = 's32[1]{0}', space=sflag, size = 0x4, scoped, tag = 'scoped memory for tpu_custom_call.1']
    #allocation5 [shape = 'u8[8192]{0}', space=vmem, size = 0x2000, scoped, tag = 'output window, operand 0, single buffered']
    #allocation6 [shape = 'u8[8192]{0}', space=vmem, size = 0x2000, scoped, tag = 'output window, operand 1, single buffered']
    #allocation7 [shape = 's32[1]{0}', space=sflag, size = 0x4, scoped, tag = 'scoped memory for tpu_custom_call.1']
    #allocation8 [shape = 'u8[8192]{0}', space=vmem, size = 0x2000, scoped, tag = 'output window, operand 2, single buffered']
    #allocation9 [shape = 'u8[8192]{0}', space=vmem, size = 0x2000, scoped, tag = 'output window, operand 3, single buffered']
    #allocation10 [shape = 's32[1]{0}', space=sflag, size = 0x4, scoped, tag = 'scoped memory for tpu_custom_call.1']
    %10 = vsyncpa [#allocation3], 0
    %11 = vsyncpa [#allocation4], 0
    %12 = vsyncpa [#allocation7], 0
    %13 = vsyncpa [#allocation10], 0
    // Predicated region
    $region2: #{tpu_custom_call.1} parent=1 // pred_check
      _
    $region3: #{tpu_custom_call.1} parent=1 // pred_check_branch
      %15 = sbr.rel (0) target = $region5
    $region4: #{tpu_custom_call.1} parent=1 // pred_region
      %17 = vsyncadd [#allocation3], 0
      %s19 = sshll.u32 %s0, 4
      %s20 = int_to_ptr.hbm [resolvable:$true] %s19
      %s21 = sshll.u32 [#allocation2], 4
      %s22 = int_to_ptr.vmem [resolvable:$true] %s21
      %24 = dma.hbm_to_vmem [thread:$0]  %s20, 256, %s22, [#allocation3]
    $region5: #{tpu_custom_call.1} parent=1 // pred_fallthru
      _
    // Predicated region
    $region6: #{tpu_custom_call.1} parent=1 // pred_check
      _
    $region7: #{tpu_custom_call.1} parent=1 // pred_check_branch
      %26 = sbr.rel (0) target = $region9
    $region8: #{tpu_custom_call.1} parent=1 // pred_region
      %28 = dma.done [#allocation3], 256
    $region9: #{tpu_custom_call.1} parent=1 // pred_fallthru
      _
    %v29 = vld [vmem:[#allocation2] sm:$0xff]
    %v30 = vld [vmem:[#allocation2 + $0x8] sm:$0xff]
    %31 = vst [vmem:[#allocation5] sm:$0xff] 0.0
    %32 = vst [vmem:[#allocation5 + $0x8] sm:$0xff] 0.0
    %33 = vst [vmem:[#allocation6] sm:$0xff] 0.0
    %34 = vst [vmem:[#allocation6 + $0x8] sm:$0xff] 0.0
    %v35 = vadd.f32 %v29, 0.0
    %v36 = vadd.f32 %v30, 0.0
    %37 = vst [vmem:[#allocation8] sm:$0xff] %v35
    %38 = vst [vmem:[#allocation8 + $0x8] sm:$0xff] %v36
    %39 = vst [vmem:[#allocation9] sm:$0xff] 1.4285714e-06
    %40 = vst [vmem:[#allocation9 + $0x8] sm:$0xff] 1.4285714e-06
    // Predicated region
    $region10: #{tpu_custom_call.1} parent=1 // pred_check
      _
    $region11: #{tpu_custom_call.1} parent=1 // pred_check_branch
      %42 = sbr.rel (0) target = $region13
    $region12: #{tpu_custom_call.1} parent=1 // pred_region
      %44 = vsyncadd [#allocation4], 0
      %s46 = sshll.u32 [#allocation5], 4
      %s47 = int_to_ptr.vmem [resolvable:$true] %s46
      %s48 = sshll.u32 %s1, 4
      %s49 = int_to_ptr.hbm [resolvable:$true] %s48
      %51 = dma.vmem_to_hbm [thread:$0]  %s47, 256, %s49, [#allocation4]
    $region13: #{tpu_custom_call.1} parent=1 // pred_fallthru
      _
    // Predicated region
    $region14: #{tpu_custom_call.1} parent=1 // pred_check
      _
    $region15: #{tpu_custom_call.1} parent=1 // pred_check_branch
      %53 = sbr.rel (0) target = $region17
    $region16: #{tpu_custom_call.1} parent=1 // pred_region
      %55 = vsyncadd [#allocation7], 0
      %s57 = sshll.u32 [#allocation6], 4
      %s58 = int_to_ptr.vmem [resolvable:$true] %s57
      %s59 = sshll.u32 %s2, 4
      %s60 = int_to_ptr.hbm [resolvable:$true] %s59
      %62 = dma.vmem_to_hbm [thread:$0]  %s58, 256, %s60, [#allocation7]
    $region17: #{tpu_custom_call.1} parent=1 // pred_fallthru
      _
    // Predicated region
    $region18: #{tpu_custom_call.1} parent=1 // pred_check
      _
    $region19: #{tpu_custom_call.1} parent=1 // pred_check_branch
      %64 = sbr.rel (0) target = $region21
    $region20: #{tpu_custom_call.1} parent=1 // pred_region
      %66 = vsyncadd [#allocation7], 0
      %s68 = sshll.u32 [#allocation8], 4
      %s69 = int_to_ptr.vmem [resolvable:$true] %s68
      %s70 = sshll.u32 %s3, 4
      %s71 = int_to_ptr.hbm [resolvable:$true] %s70
      %73 = dma.vmem_to_hbm [thread:$0]  %s69, 256, %s71, [#allocation7]
    $region21: #{tpu_custom_call.1} parent=1 // pred_fallthru
      _
    // Predicated region
    $region22: #{tpu_custom_call.1} parent=1 // pred_check
      _
    $region23: #{tpu_custom_call.1} parent=1 // pred_check_branch
      %75 = sbr.rel (0) target = $region25
    $region24: #{tpu_custom_call.1} parent=1 // pred_region
      %77 = vsyncadd [#allocation10], 0
      %s79 = sshll.u32 [#allocation9], 4
      %s80 = int_to_ptr.vmem [resolvable:$true] %s79
      %s81 = sshll.u32 %s4, 4
      %s82 = int_to_ptr.hbm [resolvable:$true] %s81
      %84 = dma.vmem_to_hbm [thread:$0]  %s80, 256, %s82, [#allocation10]
    $region25: #{tpu_custom_call.1} parent=1 // pred_fallthru
      _
    // Predicated region
    $region26: #{tpu_custom_call.1} parent=1 // pred_check
      _
    $region27: #{tpu_custom_call.1} parent=1 // pred_check_branch
      %86 = sbr.rel (0) target = $region29
    $region28: #{tpu_custom_call.1} parent=1 // pred_region
      %88 = dma.done [#allocation4], 256
    $region29: #{tpu_custom_call.1} parent=1 // pred_fallthru
      _
    // Predicated region
    $region30: #{tpu_custom_call.1} parent=1 // pred_check
      _
    $region31: #{tpu_custom_call.1} parent=1 // pred_check_branch
      %90 = sbr.rel (0) target = $region33
    $region32: #{tpu_custom_call.1} parent=1 // pred_region
      %92 = dma.done [#allocation7], 256
    $region33: #{tpu_custom_call.1} parent=1 // pred_fallthru
      _
    // Predicated region
    $region34: #{tpu_custom_call.1} parent=1 // pred_check
      _
    $region35: #{tpu_custom_call.1} parent=1 // pred_check_branch
      %94 = sbr.rel (0) target = $region37
    $region36: #{tpu_custom_call.1} parent=1 // pred_region
      %96 = dma.done [#allocation7], 256
    $region37: #{tpu_custom_call.1} parent=1 // pred_fallthru
      _
    // Predicated region
    $region38: #{tpu_custom_call.1} parent=1 // pred_check
      _
    $region39: #{tpu_custom_call.1} parent=1 // pred_check_branch
      %98 = sbr.rel (0) target = $region41
    $region40: #{tpu_custom_call.1} parent=1 // pred_region
      %100 = dma.done [#allocation10], 256
    $region41: #{tpu_custom_call.1} parent=1 // pred_fallthru
      _
    %101 = vsyncpa [#allocation3], 1
    %102 = vsyncpa [#allocation4], 1
    %103 = vsyncpa [#allocation7], 1
    %104 = vsyncpa [#allocation10], 1

</llo_original>
